<compile_context>
chip_gen: v6e
topology: v6e:2x2x1
jax: 0.10.0
libtpu: 0.0.40
codegen_flags: <defaults>
</compile_context>

<pallas_src>
import functools

import jax
import jax.numpy as jnp
import numpy as np
from jax import lax
from jax.experimental import pallas as pl
from jax.experimental.pallas import tpu as pltpu


def _round_up(n, m):
    return ((n + m - 1) // m) * m


def _dualfc_kernel(x_ref, w_ref, b_ref, o_ref, acc_ref):
    """Computes one (tm, tn) output tile; the F (reduction) axis is grid dim 2."""
    k = pl.program_id(2)

    @pl.when(k == 0)
    def _init():
        acc_ref[...] = jnp.zeros_like(acc_ref)

    # x_ref: (tm, tk), w_ref: (tn, tk)  ->  contract on the shared F axis.
    acc_ref[...] += lax.dot_general(
        x_ref[...], w_ref[...],
        dimension_numbers=(((1,), (1,)), ((), ())),
        preferred_element_type=jnp.float32,
    )

    @pl.when(k == pl.num_programs(2) - 1)
    def _finalize():
        o_ref[...] = (acc_ref[...] + b_ref[...]).astype(o_ref.dtype)


def dual_fc_forward(x, weight, bias, is_dual=True, *,
                    tm=256, tn=256, tk=256, mxu_dtype=None, use_pallas=True):
    """JAX/Pallas equivalent of DualFC.forward.

    x:      (B, num_ftrs)
    weight: (num_classes, num_ftrs)   -- PyTorch nn.Linear layout, NOT transposed
    bias:   (num_classes,)
    returns (x1, x) if is_dual else x1, where x1 = x @ weight.T + bias
    """
    B, F = x.shape
    C = weight.shape[0]
    out_dtype = x.dtype

    if not use_pallas:
        # Tiny GEMMs are dominated by pallas_call / grid-step overhead.
        x1 = (jnp.dot(x, weight.T, preferred_element_type=jnp.float32)
              + bias.astype(jnp.float32)).astype(out_dtype)
        return (x1, x) if is_dual else x1

    # ---- pad to TPU-friendly, lane-dense tile multiples ---------------------
    Bp = _round_up(B, 8)
    tm = min(tm, Bp)
    Bp = _round_up(Bp, tm)

    Fp = _round_up(F, 128)
    tk = min(tk, Fp)
    Fp = _round_up(Fp, tk)

    Cp = _round_up(C, 128)          # lane-dense output: unmasked vst, full MXU cols
    tn = min(tn, Cp)
    Cp = _round_up(Cp, tn)

    x_p = x if (Bp == B and Fp == F) else jnp.pad(x, ((0, Bp - B), (0, Fp - F)))
    w_p = weight if (Cp == C and Fp == F) else jnp.pad(
        weight, ((0, Cp - C), (0, Fp - F)))
    b_p = bias if Cp == C else jnp.pad(bias, (0, Cp - C))
    b2 = b_p.astype(jnp.float32).reshape(1, Cp)

    if mxu_dtype is not None:
        # Optional bf16 MXU operands (v6e/v7x); f32 accumulation stays in-kernel.
        x_p = x_p.astype(mxu_dtype)
        w_p = w_p.astype(mxu_dtype)

    grid = (Bp // tm, Cp // tn, Fp // tk)

    bytes_accessed = (x_p.size * x_p.dtype.itemsize
                      + w_p.size * w_p.dtype.itemsize
                      + b2.size * 4
                      + Bp * Cp * jnp.dtype(out_dtype).itemsize)

    x1_p = pl.pallas_call(
        _dualfc_kernel,
        out_shape=jax.ShapeDtypeStruct((Bp, Cp), out_dtype),
        grid=grid,
        in_specs=[
            pl.BlockSpec((tm, tk), lambda i, j, k: (i, k)),   # x tile
            pl.BlockSpec((tn, tk), lambda i, j, k: (j, k)),   # weight tile (C, F)
            pl.BlockSpec((1, tn), lambda i, j, k: (0, j)),    # bias tile
        ],
        out_specs=pl.BlockSpec((tm, tn), lambda i, j, k: (i, j)),
        scratch_shapes=[pltpu.VMEM((tm, tn), jnp.float32)],
        compiler_params=pltpu.CompilerParams(
            dimension_semantics=("parallel", "parallel", "arbitrary")),
        cost_estimate=pl.CostEstimate(
            flops=2 * Bp * Fp * Cp, transcendentals=0,
            bytes_accessed=bytes_accessed),
    )(x_p, w_p, b2)

    x1 = x1_p[:B, :C]

    if is_dual:
        return x1, x
    return x1


if __name__ == "__main__":
    # Shapes consistent with the fetal-IQA head: ResNet feature vector -> 3 classes.
    B, num_ftrs, num_classes = 64, 512, 3

    key = jax.random.PRNGKey(0)
    kx, kw, kb = jax.random.split(key, 3)

    x = jax.random.normal(kx, (B, num_ftrs), dtype=jnp.float32)
    bound = 1.0 / (num_ftrs ** 0.5)
    weight = jax.random.uniform(kw, (num_classes, num_ftrs),
                                minval=-bound, maxval=bound, dtype=jnp.float32)
    bias = jax.random.uniform(kb, (num_classes,),
                              minval=-bound, maxval=bound, dtype=jnp.float32)

    fwd = jax.jit(functools.partial(dual_fc_forward, is_dual=True))
    x1, x_pass = fwd(x, weight, bias)
    jax.block_until_ready((x1, x_pass))

    # correctness check against a full-f32 numpy reference
    ref = np.asarray(x) @ np.asarray(weight).T + np.asarray(bias)
    assert x1.shape == (B, num_classes)
    assert jnp.allclose(x1, ref, atol=2e-3, rtol=2e-3), "mismatch vs reference"
    assert jnp.array_equal(x_pass, x), "passthrough output mismatch"

    print("KERNEL_OK")
</pallas_src>

<mosaic_0001>
module attributes {stable_mosaic.version = 11 : i64} {
  func.func @_dualfc_kernel(%arg0: i32, %arg1: i32, %arg2: i32, %arg3: memref<64x256xf32, #tpu.memory_space<vmem>>, %arg4: memref<128x256xf32, #tpu.memory_space<vmem>>, %arg5: memref<1x128xf32, #tpu.memory_space<vmem>>, %arg6: memref<64x128xf32, #tpu.memory_space<vmem>>, %arg7: memref<64x128xf32, #tpu.memory_space<vmem>>) attributes {dimension_semantics = [#tpu.dimension_semantics<parallel>, #tpu.dimension_semantics<parallel>, #tpu.dimension_semantics<arbitrary>], iteration_bounds = array<i64: 1, 1, 2>, scalar_prefetch = 0 : i64, scratch_operands = 1 : i64, tpu.core_type = #tpu.core_type<tc>, window_params = [{transform_indices = @transform_0, window_bounds = array<i64: 64, 256>}, {transform_indices = @transform_1, window_bounds = array<i64: 128, 256>}, {transform_indices = @transform_2, window_bounds = array<i64: 1, 128>}, {transform_indices = @transform_3, window_bounds = array<i64: 64, 128>}]} {
    %c0_i32 = arith.constant 0 : i32
    %0 = arith.cmpi eq, %arg2, %c0_i32 : i32
    %1 = arith.extui %0 : i1 to i32
    %c0_i32_0 = arith.constant 0 : i32
    %2 = arith.cmpi ne, %1, %c0_i32_0 : i32
    scf.if %2 {
      %cst_9 = arith.constant 0.000000e+00 : f32
      %12 = vector.broadcast %cst_9 : f32 to vector<64x128xf32>
      %c0_10 = arith.constant 0 : index
      %c0_11 = arith.constant 0 : index
      %13 = vector.load %arg7[%c0_10, %c0_11] : memref<64x128xf32, #tpu.memory_space<vmem>>, vector<64x128xf32>
      tpu.vector_store %arg7[%c0_10, %c0_11], %12 {strides = array<i32>} : memref<64x128xf32, #tpu.memory_space<vmem>>, vector<64x128xf32>,
    } else {
    }
    %c0 = arith.constant 0 : index
    %c0_1 = arith.constant 0 : index
    %3 = vector.load %arg7[%c0, %c0_1] : memref<64x128xf32, #tpu.memory_space<vmem>>, vector<64x128xf32>
    %c0_2 = arith.constant 0 : index
    %c0_3 = arith.constant 0 : index
    %4 = vector.load %arg3[%c0_2, %c0_3] : memref<64x256xf32, #tpu.memory_space<vmem>>, vector<64x256xf32>
    %c0_4 = arith.constant 0 : index
    %c0_5 = arith.constant 0 : index
    %5 = vector.load %arg4[%c0_4, %c0_5] : memref<128x256xf32, #tpu.memory_space<vmem>>, vector<128x256xf32>
    %cst = arith.constant dense<0.000000e+00> : vector<64x128xf32>
    %6 = tpu.matmul %4, %5, %cst {dimension_numbers = #tpu.dot_dimension_numbers<[1], [1], [0], [0], [0, 0, 1, 0], [], []>} : vector<64x256xf32>, vector<128x256xf32>, vector<64x128xf32> -> vector<64x128xf32>
    %7 = arith.addf %3, %6 : vector<64x128xf32>
    %c0_6 = arith.constant 0 : index
    %c0_7 = arith.constant 0 : index
    %8 = vector.load %arg7[%c0_6, %c0_7] : memref<64x128xf32, #tpu.memory_space<vmem>>, vector<64x128xf32>
    tpu.vector_store %arg7[%c0_6, %c0_7], %7 {strides = array<i32>} : memref<64x128xf32, #tpu.memory_space<vmem>>, vector<64x128xf32>,
    %c1_i32 = arith.constant 1 : i32
    %9 = arith.cmpi eq, %arg2, %c1_i32 : i32
    %10 = arith.extui %9 : i1 to i32
    %c0_i32_8 = arith.constant 0 : i32
    %11 = arith.cmpi ne, %10, %c0_i32_8 : i32
    scf.if %11 {
      %c0_9 = arith.constant 0 : index
      %c0_10 = arith.constant 0 : index
      %12 = vector.load %arg7[%c0_9, %c0_10] : memref<64x128xf32, #tpu.memory_space<vmem>>, vector<64x128xf32>
      %c0_11 = arith.constant 0 : index
      %c0_12 = arith.constant 0 : index
      %13 = vector.load %arg5[%c0_11, %c0_12] : memref<1x128xf32, #tpu.memory_space<vmem>>, vector<1x128xf32>
      %14 = vector.broadcast %13 : vector<1x128xf32> to vector<64x128xf32>
      %15 = arith.addf %12, %14 : vector<64x128xf32>
      %c0_13 = arith.constant 0 : index
      %c0_14 = arith.constant 0 : index
      %16 = vector.load %arg6[%c0_13, %c0_14] : memref<64x128xf32, #tpu.memory_space<vmem>>, vector<64x128xf32>
      tpu.vector_store %arg6[%c0_13, %c0_14], %15 {strides = array<i32>} : memref<64x128xf32, #tpu.memory_space<vmem>>, vector<64x128xf32>,
    } else {
    }
    return
  }
  func.func @transform_0(%arg0: i32, %arg1: i32, %arg2: i32) -> (i32, i32) {
    %c0_i32 = arith.constant 0 : i32
    return %arg0, %arg2 : i32, i32
  }
  func.func @transform_1(%arg0: i32, %arg1: i32, %arg2: i32) -> (i32, i32) {
    %c0_i32 = arith.constant 0 : i32
    return %arg1, %arg2 : i32, i32
  }
  func.func @transform_2(%arg0: i32, %arg1: i32, %arg2: i32) -> (i32, i32) {
    %c0_i32 = arith.constant 0 : i32
    %c0_i32_0 = arith.constant 0 : i32
    return %c0_i32, %arg1 : i32, i32
  }
  func.func @transform_3(%arg0: i32, %arg1: i32, %arg2: i32) -> (i32, i32) {
    %c0_i32 = arith.constant 0 : i32
    return %arg0, %arg1 : i32, i32
  }
}

</mosaic_0001>

<llo_original>
// kernel: dual_fc_forward.1
$region0: #{dual_fc_forward.1}
  #allocation0 [shape = 'u32[]', space=smem, size = 0x4, offset = 0x4, fixed_abs, tag = 'smem constant byte address 0x4 - core index']
  #allocation1 [shape = 'u32[144,128]{1,0:T(1,128)}', space=vmem, size = 0x12000, scoped, tag = 'internal scratch']
  #allocation2 [shape = 'f32[64,128]{1,0:T(8,128)}', space=vmem, size = 0x8000, scoped, tag = 'scratch operand']
  %s0 = inlined_call_operand.vmem [shape: f32[64,512], index: 0, kind: input, shape index: {}]
  %s1 = inlined_call_operand.vmem [shape: f32[128,512], index: 1, kind: input, shape index: {}]
  %s2 = inlined_call_operand.vmem [shape: f32[1,128], index: 2, kind: input, shape index: {}]
  %s3 = inlined_call_operand.vmem [shape: f32[64,128], index: 3, kind: output, shape index: {}]
  %s4 = sld [smem:[#allocation0]]
  $region99: #{dual_fc_forward.1} parent=0
    _
  %s6 = ssub.s32 1, %s4
  %s7 = scalar_select 0, %s6, %s4
  $region1: #{dual_fc_forward.1} parent=0
    #allocation3 [shape = 'u8[131072]{0}', space=vmem, size = 0x20000, scoped, tag = 'input window, operand 0']
    #allocation4 [shape = 'u8[262144]{0}', space=vmem, size = 0x40000, scoped, tag = 'input window, operand 1']
    loop: start=0, step=1, limit=4
    $region2: #{dual_fc_forward.1} parent=1 // loop_pre_header
      _
    $region3: #{dual_fc_forward.1} parent=1 // loop_header
      %s9 = sphi 0, %s13
      %p10 = scmp.ge.s32.totalorder %s9, 4
      %s16 = sphi 0, %s35
      %s17 = sphi 0, %s31
      %s18 = sphi 0, %s27
      %s19 = sphi 0, %s16
      %s20 = sphi 0, %s17
      %s21 = sphi 0, %s18
      %s22 = sphi 0, %s19
      %s23 = sphi 0, %s20
      %s24 = sphi 0, %s21
      %s40 = sphi 0, %s42
      %s43 = sphi 0, %s40
      %s44 = sphi 0, %s43
      %s60 = sphi 0, %s44
      %s68 = sphi 0, %s70
      %s71 = sphi 0, %s68
      %s72 = sphi 0, %s71
      %s88 = sphi 0, %s72
      %s94 = sphi 0, %s96
      %s97 = sphi 0, %s94
      %s98 = sphi 0, %s97
      %s114 = sphi 0, %s98
      %s122 = sphi 0, %s124
      %s125 = sphi 0, %s122
      %s126 = sphi 0, %s125
      %s142 = sphi 0, %s126
    $region4: #{dual_fc_forward.1} parent=1 // loop_header_branch
      %12 = sbr.rel (%p10) target = $region8
    $region5: #{dual_fc_forward.1} parent=1 // loop_body
      %s14 = ssub.s32 %s9, 1
      %s15 = ssub.s32 %s9, 2
      %s25 = sadd.s32 1, %s18
      %p26 = scmp.ge.s32.totalorder %s25, 2
      %s27 = scalar_select %p26, 0, %s25
      %s28 = sadd.s32 1, %s17
      %s29 = scalar_select %p26, %s28, %s17
      %p30 = scmp.ge.s32.totalorder %s29, 1
      %s31 = scalar_select %p30, 0, %s29
      %s32 = sadd.s32 1, %s16
      %s33 = scalar_select %p30, %s32, %s16
      %p34 = scmp.ge.s32.totalorder %s33, 1
      %s35 = scalar_select %p34, 0, %s33
      %s36 = ssub.s32 %s16, %s35
      %s37 = ssub.s32 %s18, %s27
      %s38 = sor.u32 %s36, %s37
      %p39 = scmp.eq.s32.totalorder %s38, 0
      %s41 = sadd.s32 %s40, 1
      %s42 = scalar_select %p39, %s40, %s41
      %p45 = pneg %p39
      %p46 = scmp.eq.s32.totalorder %s9, 1
      %p47 = por %p45, %p46
      %p48 = scmp.ne.s32.totalorder %s40, %s43
      %p49 = scmp.eq.s32.totalorder %s9, 0
      %p50 = por %p48, %p49
      %p51 = scmp.ne.s32.totalorder %s40, %s43
      %p52 = scmp.eq.s32.totalorder %s14, 1
      %p53 = por %p51, %p52
      %p54 = scmp.ne.s32.totalorder %s43, %s44
      %p55 = scmp.eq.s32.totalorder %s14, 0
      %p56 = por %p54, %p55
      %p57 = scmp.ne.s32.totalorder %s43, %s44
      %p58 = scmp.eq.s32.totalorder %s15, 1
      %p59 = por %p57, %p58
      %p61 = scmp.ne.s32.totalorder %s44, %s60
      %p62 = scmp.eq.s32.totalorder %s15, 0
      %p63 = por %p61, %p62
      %s64 = ssub.s32 %s17, %s31
      %s65 = ssub.s32 %s18, %s27
      %s66 = sor.u32 %s64, %s65
      %p67 = scmp.eq.s32.totalorder %s66, 0
      %s69 = sadd.s32 %s68, 1
      %s70 = scalar_select %p67, %s68, %s69
      %p73 = pneg %p67
      %p74 = scmp.eq.s32.totalorder %s9, 1
      %p75 = por %p73, %p74
      %p76 = scmp.ne.s32.totalorder %s68, %s71
      %p77 = scmp.eq.s32.totalorder %s9, 0
      %p78 = por %p76, %p77
      %p79 = scmp.ne.s32.totalorder %s68, %s71
      %p80 = scmp.eq.s32.totalorder %s14, 1
      %p81 = por %p79, %p80
      %p82 = scmp.ne.s32.totalorder %s71, %s72
      %p83 = scmp.eq.s32.totalorder %s14, 0
      %p84 = por %p82, %p83
      %p85 = scmp.ne.s32.totalorder %s71, %s72
      %p86 = scmp.eq.s32.totalorder %s15, 1
      %p87 = por %p85, %p86
      %p89 = scmp.ne.s32.totalorder %s72, %s88
      %p90 = scmp.eq.s32.totalorder %s15, 0
      %p91 = por %p89, %p90
      %s92 = ssub.s32 %s17, %s31
      %p93 = scmp.eq.s32.totalorder %s92, 0
      %s95 = sadd.s32 %s94, 1
      %s96 = scalar_select %p93, %s94, %s95
      %p99 = pneg %p93
      %p100 = scmp.eq.s32.totalorder %s9, 1
      %p101 = por %p99, %p100
      %p102 = scmp.ne.s32.totalorder %s94, %s97
      %p103 = scmp.eq.s32.totalorder %s9, 0
      %p104 = por %p102, %p103
      %p105 = scmp.ne.s32.totalorder %s94, %s97
      %p106 = scmp.eq.s32.totalorder %s14, 1
      %p107 = por %p105, %p106
      %p108 = scmp.ne.s32.totalorder %s97, %s98
      %p109 = scmp.eq.s32.totalorder %s14, 0
      %p110 = por %p108, %p109
      %p111 = scmp.ne.s32.totalorder %s97, %s98
      %p112 = scmp.eq.s32.totalorder %s15, 1
      %p113 = por %p111, %p112
      %p115 = scmp.ne.s32.totalorder %s98, %s114
      %p116 = scmp.eq.s32.totalorder %s15, 0
      %p117 = por %p115, %p116
      %s118 = ssub.s32 %s16, %s35
      %s119 = ssub.s32 %s17, %s31
      %s120 = sor.u32 %s118, %s119
      %p121 = scmp.eq.s32.totalorder %s120, 0
      %s123 = sadd.s32 %s122, 1
      %s124 = scalar_select %p121, %s122, %s123
      %p127 = pneg %p121
      %p128 = scmp.eq.s32.totalorder %s9, 1
      %p129 = por %p127, %p128
      %p130 = scmp.ne.s32.totalorder %s122, %s125
      %p131 = scmp.eq.s32.totalorder %s9, 0
      %p132 = por %p130, %p131
      %p133 = scmp.ne.s32.totalorder %s122, %s125
      %p134 = scmp.eq.s32.totalorder %s14, 1
      %p135 = por %p133, %p134
      %p136 = scmp.ne.s32.totalorder %s125, %s126
      %p137 = scmp.eq.s32.totalorder %s14, 0
      %p138 = por %p136, %p137
      %p139 = scmp.ne.s32.totalorder %s125, %s126
      %p140 = scmp.eq.s32.totalorder %s15, 1
      %p141 = por %p139, %p140
      %p143 = scmp.ne.s32.totalorder %s126, %s142
      %p144 = scmp.eq.s32.totalorder %s15, 0
      %p145 = por %p143, %p144
      %p146 = scmp.le.s32.totalorder 1, %s9
      %p147 = scmp.lt.s32.totalorder %s9, 3
      %p148 = pnand %p146, %p147
      %p149 = pneg %p148
      // Predicated region
      $region9: #{dual_fc_forward.1} parent=5 // pred_check
        _
      $region10: #{dual_fc_forward.1} parent=5 // pred_check_branch
        %151 = sbr.rel (%p148) target = $region12
      $region11: #{dual_fc_forward.1} parent=5 // pred_region
        %s152 = ssub.s32 %s9, 1
        // Predicated region
        $region13: #{dual_fc_forward.1} parent=11 // pred_check
          %p153 = pneg %p110
        $region14: #{dual_fc_forward.1} parent=11 // pred_check_branch
          %155 = sbr.rel (%p153) target = $region16
        $region15: #{dual_fc_forward.1} parent=11 // pred_region
          %p156 = scmp.lt.s32.totalorder %s20, 0
          %s157 = scalar_select %p156, %s20, 0
          %s158 = scalar_lea.vmem %s2, %s157
        $region16: #{dual_fc_forward.1} parent=11 // pred_fallthru
          _
      $region12: #{dual_fc_forward.1} parent=5 // pred_fallthru
        _
      %p159 = scmp.lt.s32.totalorder %s9, 2
      // Predicated region
      $region17: #{dual_fc_forward.1} parent=5 // pred_check
        %p160 = pneg %p159
      $region18: #{dual_fc_forward.1} parent=5 // pred_check_branch
        %162 = sbr.rel (%p160) target = $region20
      $region19: #{dual_fc_forward.1} parent=5 // pred_region
        // Predicated region
        $region21: #{dual_fc_forward.1} parent=19 // pred_check
          %p163 = pneg %p50
        $region22: #{dual_fc_forward.1} parent=19 // pred_check_branch
          %165 = sbr.rel (%p163) target = $region24
        $region23: #{dual_fc_forward.1} parent=19 // pred_region
          %s166 = sand.u32 %s40, 1
          %s167 = sand.u32 %s40, 1
          %s168 = smul.addr %s167, 128
          %s169 = scalar_lea.vmem [#allocation3], %s168
          %s170 = smul.u32 8, %s16
          %s171 = smul.u32 2, %s18
          %s172 = smul.addr %s170, 4
          %s173 = sadd.s32 %s171, %s172
          %s174 = smul.addr %s173, 8
          %s175 = scalar_lea.vmem %s0, %s174
          // Predicated region
          $region25: #{dual_fc_forward.1} parent=23 // pred_check
            _
          $region26: #{dual_fc_forward.1} parent=23 // pred_check_branch
            %177 = sbr.rel (0) target = $region28
          $region27: #{dual_fc_forward.1} parent=23 // pred_region
            // Predicated region
            $region29: #{dual_fc_forward.1} parent=27 // pred_check
              _
            $region30: #{dual_fc_forward.1} parent=27 // pred_check_branch
              %179 = sbr.rel (0) target = $region32
            $region31: #{dual_fc_forward.1} parent=27 // pred_region
              loop: start=0, step=1, limit=1
              $region33: #{dual_fc_forward.1} parent=31 // loop_pre_header
                _
              $region34: #{dual_fc_forward.1} parent=31 // loop_header
                %s181 = sphi 0, %s185
                %p182 = scmp.ge.s32.totalorder %s181, 1
                %s186 = sphi %s175, %s175
                %s187 = sphi %s169, %s169
              $region35: #{dual_fc_forward.1} parent=31 // loop_header_branch
                %184 = sbr.rel (%p182) target = $region39
              $region36: #{dual_fc_forward.1} parent=31 // loop_body
                %v188 = vld [vmem:[%s186] sm:$0xff]
                %189 = vst [vmem:[%s187] sm:$0xff] %v188
                %v190 = vld [vmem:[%s186 + $0x8] sm:$0xff]
                %191 = vst [vmem:[%s187 + $0x8] sm:$0xff] %v190
                %v192 = vld [vmem:[%s186 + $0x20] sm:$0xff]
                %193 = vst [vmem:[%s187 + $0x10] sm:$0xff] %v192
                %v194 = vld [vmem:[%s186 + $0x28] sm:$0xff]
                %195 = vst [vmem:[%s187 + $0x18] sm:$0xff] %v194
                %v196 = vld [vmem:[%s186 + $0x40] sm:$0xff]
                %197 = vst [vmem:[%s187 + $0x20] sm:$0xff] %v196
                %v198 = vld [vmem:[%s186 + $0x48] sm:$0xff]
                %199 = vst [vmem:[%s187 + $0x28] sm:$0xff] %v198
                %v200 = vld [vmem:[%s186 + $0x60] sm:$0xff]
                %201 = vst [vmem:[%s187 + $0x30] sm:$0xff] %v200
                %v202 = vld [vmem:[%s186 + $0x68] sm:$0xff]
                %203 = vst [vmem:[%s187 + $0x38] sm:$0xff] %v202
                %v204 = vld [vmem:[%s186 + $0x80] sm:$0xff]
                %205 = vst [vmem:[%s187 + $0x40] sm:$0xff] %v204
                %v206 = vld [vmem:[%s186 + $0x88] sm:$0xff]
                %207 = vst [vmem:[%s187 + $0x48] sm:$0xff] %v206
                %v208 = vld [vmem:[%s186 + $0xa0] sm:$0xff]
                %209 = vst [vmem:[%s187 + $0x50] sm:$0xff] %v208
                %v210 = vld [vmem:[%s186 + $0xa8] sm:$0xff]
                %211 = vst [vmem:[%s187 + $0x58] sm:$0xff] %v210
                %v212 = vld [vmem:[%s186 + $0xc0] sm:$0xff]
                %213 = vst [vmem:[%s187 + $0x60] sm:$0xff] %v212
                %v214 = vld [vmem:[%s186 + $0xc8] sm:$0xff]
                %215 = vst [vmem:[%s187 + $0x68] sm:$0xff] %v214
                %v216 = vld [vmem:[%s186 + $0xe0] sm:$0xff]
                %217 = vst [vmem:[%s187 + $0x70] sm:$0xff] %v216
                %v218 = vld [vmem:[%s186 + $0xe8] sm:$0xff]
                %219 = vst [vmem:[%s187 + $0x78] sm:$0xff] %v218
              $region37: #{dual_fc_forward.1} parent=31 // loop_footer
                %s185 = sadd.s32 1, %s181
              $region38: #{dual_fc_forward.1} parent=31 // loop_footer_branch
                %180 = sbr.rel target = $region34
              $region39: #{dual_fc_forward.1} parent=31 // loop_exit
                _
            $region32: #{dual_fc_forward.1} parent=27 // pred_fallthru
              _
            // Predicated region
            $region40: #{dual_fc_forward.1} parent=27 // pred_check
              _
            $region41: #{dual_fc_forward.1} parent=27 // pred_check_branch
              %221 = sbr.rel target = $region43
            $region42: #{dual_fc_forward.1} parent=27 // pred_region
              _
            $region43: #{dual_fc_forward.1} parent=27 // pred_fallthru
              _
          $region28: #{dual_fc_forward.1} parent=23 // pred_fallthru
            _
          %222 = vnop
        $region24: #{dual_fc_forward.1} parent=19 // pred_fallthru
          _
        // Predicated region
        $region44: #{dual_fc_forward.1} parent=19 // pred_check
          %p223 = pneg %p78
        $region45: #{dual_fc_forward.1} parent=19 // pred_check_branch
          %225 = sbr.rel (%p223) target = $region47
        $region46: #{dual_fc_forward.1} parent=19 // pred_region
          %s226 = sand.u32 %s68, 1
          %s227 = sand.u32 %s68, 1
          %s228 = smul.addr %s227, 256
          %s229 = scalar_lea.vmem [#allocation4], %s228
          %s230 = smul.u32 16, %s17
          %s231 = smul.u32 2, %s18
          %s232 = smul.addr %s230, 4
          %s233 = sadd.s32 %s231, %s232
          %s234 = smul.addr %s233, 8
          %s235 = scalar_lea.vmem %s1, %s234
          // Predicated region
          $region48: #{dual_fc_forward.1} parent=46 // pred_check
            _
          $region49: #{dual_fc_forward.1} parent=46 // pred_check_branch
            %237 = sbr.rel (0) target = $region51
          $region50: #{dual_fc_forward.1} parent=46 // pred_region
            // Predicated region
            $region52: #{dual_fc_forward.1} parent=50 // pred_check
              _
            $region53: #{dual_fc_forward.1} parent=50 // pred_check_branch
              %239 = sbr.rel (0) target = $region55
            $region54: #{dual_fc_forward.1} parent=50 // pred_region
              loop: start=0, step=1, limit=1
              $region56: #{dual_fc_forward.1} parent=54 // loop_pre_header
                _
              $region57: #{dual_fc_forward.1} parent=54 // loop_header
                %s241 = sphi 0, %s245
                %p242 = scmp.ge.s32.totalorder %s241, 1
                %s246 = sphi %s235, %s235
                %s247 = sphi %s229, %s229
              $region58: #{dual_fc_forward.1} parent=54 // loop_header_branch
                %244 = sbr.rel (%p242) target = $region62
              $region59: #{dual_fc_forward.1} parent=54 // loop_body
                %v248 = vld [vmem:[%s246] sm:$0xff]
                %249 = vst [vmem:[%s247] sm:$0xff] %v248
                %v250 = vld [vmem:[%s246 + $0x8] sm:$0xff]
                %251 = vst [vmem:[%s247 + $0x8] sm:$0xff] %v250
                %v252 = vld [vmem:[%s246 + $0x20] sm:$0xff]
                %253 = vst [vmem:[%s247 + $0x10] sm:$0xff] %v252
                %v254 = vld [vmem:[%s246 + $0x28] sm:$0xff]
                %255 = vst [vmem:[%s247 + $0x18] sm:$0xff] %v254
                %v256 = vld [vmem:[%s246 + $0x40] sm:$0xff]
                %257 = vst [vmem:[%s247 + $0x20] sm:$0xff] %v256
                %v258 = vld [vmem:[%s246 + $0x48] sm:$0xff]
                %259 = vst [vmem:[%s247 + $0x28] sm:$0xff] %v258
                %v260 = vld [vmem:[%s246 + $0x60] sm:$0xff]
                %261 = vst [vmem:[%s247 + $0x30] sm:$0xff] %v260
                %v262 = vld [vmem:[%s246 + $0x68] sm:$0xff]
                %263 = vst [vmem:[%s247 + $0x38] sm:$0xff] %v262
                %v264 = vld [vmem:[%s246 + $0x80] sm:$0xff]
                %265 = vst [vmem:[%s247 + $0x40] sm:$0xff] %v264
                %v266 = vld [vmem:[%s246 + $0x88] sm:$0xff]
                %267 = vst [vmem:[%s247 + $0x48] sm:$0xff] %v266
                %v268 = vld [vmem:[%s246 + $0xa0] sm:$0xff]
                %269 = vst [vmem:[%s247 + $0x50] sm:$0xff] %v268
                %v270 = vld [vmem:[%s246 + $0xa8] sm:$0xff]
                %271 = vst [vmem:[%s247 + $0x58] sm:$0xff] %v270
                %v272 = vld [vmem:[%s246 + $0xc0] sm:$0xff]
                %273 = vst [vmem:[%s247 + $0x60] sm:$0xff] %v272
                %v274 = vld [vmem:[%s246 + $0xc8] sm:$0xff]
                %275 = vst [vmem:[%s247 + $0x68] sm:$0xff] %v274
                %v276 = vld [vmem:[%s246 + $0xe0] sm:$0xff]
                %277 = vst [vmem:[%s247 + $0x70] sm:$0xff] %v276
                %v278 = vld [vmem:[%s246 + $0xe8] sm:$0xff]
                %279 = vst [vmem:[%s247 + $0x78] sm:$0xff] %v278
                %v280 = vld [vmem:[%s246 + $0x100] sm:$0xff]
                %281 = vst [vmem:[%s247 + $0x80] sm:$0xff] %v280
                %v282 = vld [vmem:[%s246 + $0x108] sm:$0xff]
                %283 = vst [vmem:[%s247 + $0x88] sm:$0xff] %v282
                %v284 = vld [vmem:[%s246 + $0x120] sm:$0xff]
                %285 = vst [vmem:[%s247 + $0x90] sm:$0xff] %v284
                %v286 = vld [vmem:[%s246 + $0x128] sm:$0xff]
                %287 = vst [vmem:[%s247 + $0x98] sm:$0xff] %v286
                %v288 = vld [vmem:[%s246 + $0x140] sm:$0xff]
                %289 = vst [vmem:[%s247 + $0xa0] sm:$0xff] %v288
                %v290 = vld [vmem:[%s246 + $0x148] sm:$0xff]
                %291 = vst [vmem:[%s247 + $0xa8] sm:$0xff] %v290
                %v292 = vld [vmem:[%s246 + $0x160] sm:$0xff]
                %293 = vst [vmem:[%s247 + $0xb0] sm:$0xff] %v292
                %v294 = vld [vmem:[%s246 + $0x168] sm:$0xff]
                %295 = vst [vmem:[%s247 + $0xb8] sm:$0xff] %v294
                %v296 = vld [vmem:[%s246 + $0x180] sm:$0xff]
                %297 = vst [vmem:[%s247 + $0xc0] sm:$0xff] %v296
                %v298 = vld [vmem:[%s246 + $0x188] sm:$0xff]
                %299 = vst [vmem:[%s247 + $0xc8] sm:$0xff] %v298
                %v300 = vld [vmem:[%s246 + $0x1a0] sm:$0xff]
                %301 = vst [vmem:[%s247 + $0xd0] sm:$0xff] %v300
                %v302 = vld [vmem:[%s246 + $0x1a8] sm:$0xff]
                %303 = vst [vmem:[%s247 + $0xd8] sm:$0xff] %v302
                %v304 = vld [vmem:[%s246 + $0x1c0] sm:$0xff]
                %305 = vst [vmem:[%s247 + $0xe0] sm:$0xff] %v304
                %v306 = vld [vmem:[%s246 + $0x1c8] sm:$0xff]
                %307 = vst [vmem:[%s247 + $0xe8] sm:$0xff] %v306
                %v308 = vld [vmem:[%s246 + $0x1e0] sm:$0xff]
                %309 = vst [vmem:[%s247 + $0xf0] sm:$0xff] %v308
                %v310 = vld [vmem:[%s246 + $0x1e8] sm:$0xff]
                %311 = vst [vmem:[%s247 + $0xf8] sm:$0xff] %v310
              $region60: #{dual_fc_forward.1} parent=54 // loop_footer
                %s245 = sadd.s32 1, %s241
              $region61: #{dual_fc_forward.1} parent=54 // loop_footer_branch
                %240 = sbr.rel target = $region57
              $region62: #{dual_fc_forward.1} parent=54 // loop_exit
                _
            $region55: #{dual_fc_forward.1} parent=50 // pred_fallthru
              _
            // Predicated region
            $region63: #{dual_fc_forward.1} parent=50 // pred_check
              _
            $region64: #{dual_fc_forward.1} parent=50 // pred_check_branch
              %313 = sbr.rel target = $region66
            $region65: #{dual_fc_forward.1} parent=50 // pred_region
              _
            $region66: #{dual_fc_forward.1} parent=50 // pred_fallthru
              _
          $region51: #{dual_fc_forward.1} parent=46 // pred_fallthru
            _
          %314 = vnop
        $region47: #{dual_fc_forward.1} parent=19 // pred_fallthru
          _
      $region20: #{dual_fc_forward.1} parent=5 // pred_fallthru
        _
      %p315 = scmp.le.s32.totalorder 1, %s9
      %p316 = scmp.lt.s32.totalorder %s9, 3
      %p317 = pnand %p315, %p316
      %p318 = pneg %p317
      // Predicated region
      $region67: #{dual_fc_forward.1} parent=5 // pred_check
        _
      $region68: #{dual_fc_forward.1} parent=5 // pred_check_branch
        %320 = sbr.rel (%p317) target = $region70
      $region69: #{dual_fc_forward.1} parent=5 // pred_region
        %s321 = ssub.s32 %s9, 1
        %s322 = sand.u32 %s43, 1
        %s323 = sand.u32 %s43, 1
        %s324 = smul.addr %s323, 128
        %s325 = scalar_lea.vmem [#allocation3], %s324
        // Predicated region
        $region71: #{dual_fc_forward.1} parent=69 // pred_check
          %p326 = pneg %p56
        $region72: #{dual_fc_forward.1} parent=69 // pred_check_branch
          %328 = sbr.rel (%p326) target = $region74
        $region73: #{dual_fc_forward.1} parent=69 // pred_region
          _
        $region74: #{dual_fc_forward.1} parent=69 // pred_fallthru
          _
        %s329 = sand.u32 %s71, 1
        %s330 = sand.u32 %s71, 1
        %s331 = smul.addr %s330, 256
        %s332 = scalar_lea.vmem [#allocation4], %s331
        // Predicated region
        $region75: #{dual_fc_forward.1} parent=69 // pred_check
          %p333 = pneg %p84
        $region76: #{dual_fc_forward.1} parent=69 // pred_check_branch
          %335 = sbr.rel (%p333) target = $region78
        $region77: #{dual_fc_forward.1} parent=69 // pred_region
          _
        $region78: #{dual_fc_forward.1} parent=69 // pred_fallthru
          _
        %s336 = sand.u32 %s43, 1
        %s337 = sand.u32 %s43, 1
        %s338 = smul.addr %s337, 128
        %s339 = scalar_lea.vmem [#allocation3], %s338
        %p340 = pneg %p56
        %p341 = pneg %p53
        %s342 = sand.u32 %s71, 1
        %s343 = sand.u32 %s71, 1
        %s344 = smul.addr %s343, 256
        %s345 = scalar_lea.vmem [#allocation4], %s344
        %p346 = pneg %p84
        %p347 = pneg %p81
        %p348 = scmp.lt.s32.totalorder %s20, 0
        %s349 = scalar_select %p348, %s20, 0
        %s350 = scalar_lea.vmem %s2, %s349
        %p351 = pneg %p110
        %p352 = pneg %p107
        %p353 = pneg %p138
        %p354 = pneg %p135
        %s355 = smul.u32 8, %s19
        %p356 = scmp.lt.s32.totalorder %s355, 7
        %s357 = scalar_select %p356, %s355, 7
        %p358 = scmp.lt.s32.totalorder %s20, 0
        %s359 = scalar_select %p358, %s20, 0
        %s360 = sadd.s32 %s359, %s357
        %s361 = smul.addr %s360, 8
        %s362 = scalar_lea.vmem %s3, %s361
        %s363 = smul.u32 8, %s19
        %s364 = smul.u32 2, %s21
        %s365 = smul.u32 16, %s20
        %s366 = smul.u32 2, %s21
        %p367 = scmp.lt.s32.totalorder %s20, 0
        %s368 = scalar_select %p367, %s20, 0
        %s369 = scalar_lea.vmem %s2, %s368
        %s370 = smul.u32 8, %s19
        %p371 = scmp.lt.s32.totalorder %s370, 7
        %s372 = scalar_select %p371, %s370, 7
        %p373 = scmp.lt.s32.totalorder %s20, 0
        %s374 = scalar_select %p373, %s20, 0
        %s375 = sadd.s32 %s374, %s372
        %s376 = smul.addr %s375, 8
        %s377 = scalar_lea.vmem %s3, %s376
        %s378 = smul.u32 8, %s19
        %p379 = scmp.eq.s32.totalorder %s21, 0
        // Predicated region
        $region79: #{dual_fc_forward.1} parent=69 // pred_check
          %p380 = pneg %p379
        $region80: #{dual_fc_forward.1} parent=69 // pred_check_branch
          %382 = sbr.rel (%p380) target = $region82
        $region81: #{dual_fc_forward.1} parent=69 // pred_region
          %383 = vst [vmem:[#allocation2] sm:$0xff] 0.0
          %384 = vst [vmem:[#allocation2 + $0x8] sm:$0xff] 0.0
          %385 = vst [vmem:[#allocation2 + $0x10] sm:$0xff] 0.0
          %386 = vst [vmem:[#allocation2 + $0x18] sm:$0xff] 0.0
          %387 = vst [vmem:[#allocation2 + $0x20] sm:$0xff] 0.0
          %388 = vst [vmem:[#allocation2 + $0x28] sm:$0xff] 0.0
          %389 = vst [vmem:[#allocation2 + $0x30] sm:$0xff] 0.0
          %390 = vst [vmem:[#allocation2 + $0x38] sm:$0xff] 0.0
        $region82: #{dual_fc_forward.1} parent=69 // pred_fallthru
          _
        %v391 = vld [vmem:[#allocation2] sm:$0xff]
        %v392 = vld [vmem:[#allocation2 + $0x8] sm:$0xff]
        %v393 = vld [vmem:[#allocation2 + $0x10] sm:$0xff]
        %v394 = vld [vmem:[#allocation2 + $0x18] sm:$0xff]
        %v395 = vld [vmem:[#allocation2 + $0x20] sm:$0xff]
        %v396 = vld [vmem:[#allocation2 + $0x28] sm:$0xff]
        %v397 = vld [vmem:[#allocation2 + $0x30] sm:$0xff]
        %v398 = vld [vmem:[#allocation2 + $0x38] sm:$0xff]
        %v399 = vld [vmem:[%s325] sm:$0xff]
        %v400 = vld [vmem:[%s325 + $0x8] sm:$0xff]
        %v401 = vld [vmem:[%s325 + $0x10] sm:$0xff]
        %v402 = vld [vmem:[%s325 + $0x18] sm:$0xff]
        %v403 = vld [vmem:[%s325 + $0x20] sm:$0xff]
        %v404 = vld [vmem:[%s325 + $0x28] sm:$0xff]
        %v405 = vld [vmem:[%s325 + $0x30] sm:$0xff]
        %v406 = vld [vmem:[%s325 + $0x38] sm:$0xff]
        %v407 = vld [vmem:[%s325 + $0x40] sm:$0xff]
        %v408 = vld [vmem:[%s325 + $0x48] sm:$0xff]
        %v409 = vld [vmem:[%s325 + $0x50] sm:$0xff]
        %v410 = vld [vmem:[%s325 + $0x58] sm:$0xff]
        %v411 = vld [vmem:[%s325 + $0x60] sm:$0xff]
        %v412 = vld [vmem:[%s325 + $0x68] sm:$0xff]
        %v413 = vld [vmem:[%s325 + $0x70] sm:$0xff]
        %v414 = vld [vmem:[%s325 + $0x78] sm:$0xff]
        %v415 = vld [vmem:[%s332] sm:$0xff]
        %v416 = vld [vmem:[%s332 + $0x8] sm:$0xff]
        %v417 = vld [vmem:[%s332 + $0x10] sm:$0xff]
        %v418 = vld [vmem:[%s332 + $0x18] sm:$0xff]
        %v419 = vld [vmem:[%s332 + $0x20] sm:$0xff]
        %v420 = vld [vmem:[%s332 + $0x28] sm:$0xff]
        %v421 = vld [vmem:[%s332 + $0x30] sm:$0xff]
        %v422 = vld [vmem:[%s332 + $0x38] sm:$0xff]
        %v423 = vld [vmem:[%s332 + $0x40] sm:$0xff]
        %v424 = vld [vmem:[%s332 + $0x48] sm:$0xff]
        %v425 = vld [vmem:[%s332 + $0x50] sm:$0xff]
        %v426 = vld [vmem:[%s332 + $0x58] sm:$0xff]
        %v427 = vld [vmem:[%s332 + $0x60] sm:$0xff]
        %v428 = vld [vmem:[%s332 + $0x68] sm:$0xff]
        %v429 = vld [vmem:[%s332 + $0x70] sm:$0xff]
        %v430 = vld [vmem:[%s332 + $0x78] sm:$0xff]
        %v431 = vld [vmem:[%s332 + $0x80] sm:$0xff]
        %v432 = vld [vmem:[%s332 + $0x88] sm:$0xff]
        %v433 = vld [vmem:[%s332 + $0x90] sm:$0xff]
        %v434 = vld [vmem:[%s332 + $0x98] sm:$0xff]
        %v435 = vld [vmem:[%s332 + $0xa0] sm:$0xff]
        %v436 = vld [vmem:[%s332 + $0xa8] sm:$0xff]
        %v437 = vld [vmem:[%s332 + $0xb0] sm:$0xff]
        %v438 = vld [vmem:[%s332 + $0xb8] sm:$0xff]
        %v439 = vld [vmem:[%s332 + $0xc0] sm:$0xff]
        %v440 = vld [vmem:[%s332 + $0xc8] sm:$0xff]
        %v441 = vld [vmem:[%s332 + $0xd0] sm:$0xff]
        %v442 = vld [vmem:[%s332 + $0xd8] sm:$0xff]
        %v443 = vld [vmem:[%s332 + $0xe0] sm:$0xff]
        %v444 = vld [vmem:[%s332 + $0xe8] sm:$0xff]
        %v445 = vld [vmem:[%s332 + $0xf0] sm:$0xff]
        %v446 = vld [vmem:[%s332 + $0xf8] sm:$0xff]
        %447 = vmatprep.subr.mxu0 %v446
        %448 = vmatpush1.xpose.msra.mxu0 %v445
        %449 = vmatprep.subr.mxu0 %v444
        %450 = vmatpush1.xpose.msra.mxu0 %v443
        %451 = vmatprep.subr.mxu0 %v442
        %452 = vmatpush1.xpose.msra.mxu0 %v441
        %453 = vmatprep.subr.mxu0 %v440
        %454 = vmatpush1.xpose.msra.mxu0 %v439
        %455 = vmatprep.subr.mxu0 %v438
        %456 = vmatpush1.xpose.msra.mxu0 %v437
        %457 = vmatprep.subr.mxu0 %v436
        %458 = vmatpush1.xpose.msra.mxu0 %v435
        %459 = vmatprep.subr.mxu0 %v434
        %460 = vmatpush1.xpose.msra.mxu0 %v433
        %461 = vmatprep.subr.mxu0 %v432
        %462 = vmatpush1.xpose.msra.mxu0 %v431
        %463 = vmatprep.subr.mxu0 %v430
        %464 = vmatpush1.xpose.msra.mxu0 %v429
        %465 = vmatprep.subr.mxu0 %v428
        %466 = vmatpush1.xpose.msra.mxu0 %v427
        %467 = vmatprep.subr.mxu0 %v426
        %468 = vmatpush1.xpose.msra.mxu0 %v425
        %469 = vmatprep.subr.mxu0 %v424
        %470 = vmatpush1.xpose.msra.mxu0 %v423
        %471 = vmatprep.subr.mxu0 %v422
        %472 = vmatpush1.xpose.msra.mxu0 %v421
        %473 = vmatprep.subr.mxu0 %v420
        %474 = vmatpush1.xpose.msra.mxu0 %v419
        %475 = vmatprep.subr.mxu0 %v418
        %476 = vmatpush1.xpose.msra.mxu0 %v417
        %477 = vmatprep.subr.mxu0 %v416
        %478 = vmatpush1.xpose.msra.mxu0 %v415
        %479 = vmatprep.subr.mxu0 0.0
        %480 = vmatpush2.xpose.msra.mxu0 0.0
        %481 = vmatprep.subr.mxu0 0.0
        %482 = vmatpush2.xpose.msra.mxu0 0.0
        %483 = vmatprep.subr.mxu0 0.0
        %484 = vmatpush2.xpose.msra.mxu0 0.0
        %485 = vmatprep.subr.mxu0 0.0
        %486 = vmatpush2.xpose.msra.mxu0 0.0
        %487 = vmatprep.subr.mxu0 0.0
        %488 = vmatpush2.xpose.msra.mxu0 0.0
        %489 = vmatprep.subr.mxu0 0.0
        %490 = vmatpush2.xpose.msra.mxu0 0.0
        %491 = vmatprep.subr.mxu0 0.0
        %492 = vmatpush2.xpose.msra.mxu0 0.0
        %493 = vmatprep.subr.mxu0 0.0
        %494 = vmatpush2.xpose.msra.mxu0 0.0
        %495 = vmatprep.subr.mxu0 0.0
        %496 = vmatpush2.xpose.msra.mxu0 0.0
        %497 = vmatprep.subr.mxu0 0.0
        %498 = vmatpush2.xpose.msra.mxu0 0.0
        %499 = vmatprep.subr.mxu0 0.0
        %500 = vmatpush2.xpose.msra.mxu0 0.0
        %501 = vmatprep.subr.mxu0 0.0
        %502 = vmatpush2.xpose.msra.mxu0 0.0
        %503 = vmatprep.subr.mxu0 0.0
        %504 = vmatpush2.xpose.msra.mxu0 0.0
        %505 = vmatprep.subr.mxu0 0.0
        %506 = vmatpush2.xpose.msra.mxu0 0.0
        %507 = vmatprep.subr.mxu0 0.0
        %508 = vmatpush2.xpose.msra.mxu0 0.0
        %509 = vmatprep.subr.mxu0 0.0
        %510 = vmatpush2.xpose.msra.mxu0 0.0
        %511 = vmatprep.mubr.f32.mxu0 %v400
        %512 = vmatmul.mubr.f32.gmra.mxu0 %v399
        %v513 = vpop.f32.mrf.mxu0
        %v514 = vadd.f32 0.0, %v513
        %v515 = vpop.f32.mrf.mxu0
        %516 = vmatprep.mubr.f32.mxu0 %v402
        %517 = vmatmul.mubr.f32.gmra.mxu0 %v401
        %v518 = vpop.f32.mrf.mxu0
        %v519 = vadd.f32 0.0, %v518
        %v520 = vpop.f32.mrf.mxu0
        %521 = vmatprep.mubr.f32.mxu0 %v404
        %522 = vmatmul.mubr.f32.gmra.mxu0 %v403
        %v523 = vpop.f32.mrf.mxu0
        %v524 = vadd.f32 0.0, %v523
        %v525 = vpop.f32.mrf.mxu0
        %526 = vmatprep.mubr.f32.mxu0 %v406
        %527 = vmatmul.mubr.f32.gmra.mxu0 %v405
        %v528 = vpop.f32.mrf.mxu0
        %v529 = vadd.f32 0.0, %v528
        %v530 = vpop.f32.mrf.mxu0
        %531 = vmatprep.mubr.f32.mxu0 %v408
        %532 = vmatmul.mubr.f32.gmra.mxu0 %v407
        %v533 = vpop.f32.mrf.mxu0
        %v534 = vadd.f32 0.0, %v533
        %v535 = vpop.f32.mrf.mxu0
        %536 = vmatprep.mubr.f32.mxu0 %v410
        %537 = vmatmul.mubr.f32.gmra.mxu0 %v409
        %v538 = vpop.f32.mrf.mxu0
        %v539 = vadd.f32 0.0, %v538
        %v540 = vpop.f32.mrf.mxu0
        %541 = vmatprep.mubr.f32.mxu0 %v412
        %542 = vmatmul.mubr.f32.gmra.mxu0 %v411
        %v543 = vpop.f32.mrf.mxu0
        %v544 = vadd.f32 0.0, %v543
        %v545 = vpop.f32.mrf.mxu0
        %546 = vmatprep.mubr.f32.mxu0 %v414
        %547 = vmatmul.mubr.f32.gmra.mxu0 %v413
        %v548 = vpop.f32.mrf.mxu0
        %v549 = vadd.f32 0.0, %v548
        %v550 = vpop.f32.mrf.mxu0
        %551 = vdwg.mxu0
        %v552 = vadd.f32 %v391, %v514
        %v553 = vadd.f32 %v392, %v519
        %v554 = vadd.f32 %v393, %v524
        %v555 = vadd.f32 %v394, %v529
        %v556 = vadd.f32 %v395, %v534
        %v557 = vadd.f32 %v396, %v539
        %v558 = vadd.f32 %v397, %v544
        %v559 = vadd.f32 %v398, %v549
        %560 = vst [vmem:[#allocation2] sm:$0xff] %v552
        %561 = vst [vmem:[#allocation2 + $0x8] sm:$0xff] %v553
        %562 = vst [vmem:[#allocation2 + $0x10] sm:$0xff] %v554
        %563 = vst [vmem:[#allocation2 + $0x18] sm:$0xff] %v555
        %564 = vst [vmem:[#allocation2 + $0x20] sm:$0xff] %v556
        %565 = vst [vmem:[#allocation2 + $0x28] sm:$0xff] %v557
        %566 = vst [vmem:[#allocation2 + $0x30] sm:$0xff] %v558
        %567 = vst [vmem:[#allocation2 + $0x38] sm:$0xff] %v559
        %p568 = scmp.eq.s32.totalorder %s21, 1
        // Predicated region
        $region83: #{dual_fc_forward.1} parent=69 // pred_check
          %p569 = pneg %p568
        $region84: #{dual_fc_forward.1} parent=69 // pred_check_branch
          %571 = sbr.rel (%p569) target = $region86
        $region85: #{dual_fc_forward.1} parent=69 // pred_region
          %v572 = vld [vmem:[#allocation2] sm:$0xff]
          %v573 = vld [vmem:[#allocation2 + $0x8] sm:$0xff]
          %v574 = vld [vmem:[#allocation2 + $0x10] sm:$0xff]
          %v575 = vld [vmem:[#allocation2 + $0x18] sm:$0xff]
          %v576 = vld [vmem:[#allocation2 + $0x20] sm:$0xff]
          %v577 = vld [vmem:[#allocation2 + $0x28] sm:$0xff]
          %v578 = vld [vmem:[#allocation2 + $0x30] sm:$0xff]
          %v579 = vld [vmem:[#allocation2 + $0x38] sm:$0xff]
          %v580 = vld [vmem:[%s369] sm:$0x1]
          %v582 = vlaneseq
          %v583 = vshrl.u32 %v582, 7
          %v584 = vsub.s32 0, %v583
          %v585 = vrot.slane %v580, %v584
          %v587 = vadd.f32 %v572, %v585
          %v588 = vadd.f32 %v573, %v585
          %v589 = vadd.f32 %v574, %v585
          %v590 = vadd.f32 %v575, %v585
          %v591 = vadd.f32 %v576, %v585
          %v592 = vadd.f32 %v577, %v585
          %v593 = vadd.f32 %v578, %v585
          %v594 = vadd.f32 %v579, %v585
          %595 = vst [vmem:[%s377] sm:$0xff] %v587
          %596 = vst [vmem:[%s377 + $0x8] sm:$0xff] %v588
          %597 = vst [vmem:[%s377 + $0x10] sm:$0xff] %v589
          %598 = vst [vmem:[%s377 + $0x18] sm:$0xff] %v590
          %599 = vst [vmem:[%s377 + $0x20] sm:$0xff] %v591
          %600 = vst [vmem:[%s377 + $0x28] sm:$0xff] %v592
          %601 = vst [vmem:[%s377 + $0x30] sm:$0xff] %v593
          %602 = vst [vmem:[%s377 + $0x38] sm:$0xff] %v594
        $region86: #{dual_fc_forward.1} parent=69 // pred_fallthru
          _
        %s603 = smul.u32 8, %s19
        %p604 = scmp.lt.s32.totalorder %s603, 7
        %s605 = scalar_select %p604, %s603, 7
        %p606 = scmp.lt.s32.totalorder %s20, 0
        %s607 = scalar_select %p606, %s20, 0
        %s608 = sadd.s32 %s607, %s605
        %s609 = smul.addr %s608, 8
        %s610 = scalar_lea.vmem %s3, %s609
        // Predicated region
        $region87: #{dual_fc_forward.1} parent=69 // pred_check
          %p611 = pneg %p135
        $region88: #{dual_fc_forward.1} parent=69 // pred_check_branch
          %613 = sbr.rel (%p611) target = $region90
        $region89: #{dual_fc_forward.1} parent=69 // pred_region
          %s614 = smul.u32 8, %s19
        $region90: #{dual_fc_forward.1} parent=69 // pred_fallthru
          _
        // Predicated region
        $region91: #{dual_fc_forward.1} parent=69 // pred_check
          %p615 = pneg %p135
        $region92: #{dual_fc_forward.1} parent=69 // pred_check_branch
          %617 = sbr.rel (%p615) target = $region94
        $region93: #{dual_fc_forward.1} parent=69 // pred_region
          %s618 = smul.u32 8, %s19
          %p619 = scmp.lt.s32.totalorder %s618, 7
          %s620 = scalar_select %p619, %s618, 7
          %p621 = scmp.lt.s32.totalorder %s20, 0
          %s622 = scalar_select %p621, %s20, 0
          %s623 = sadd.s32 %s622, %s620
          %s624 = smul.addr %s623, 8
          %s625 = scalar_lea.vmem %s3, %s624
        $region94: #{dual_fc_forward.1} parent=69 // pred_fallthru
          _
      $region70: #{dual_fc_forward.1} parent=5 // pred_fallthru
        _
      %p626 = scmp.le.s32.totalorder 2, %s9
      // Predicated region
      $region95: #{dual_fc_forward.1} parent=5 // pred_check
        %p627 = pneg %p626
      $region96: #{dual_fc_forward.1} parent=5 // pred_check_branch
        %629 = sbr.rel (%p627) target = $region98
      $region97: #{dual_fc_forward.1} parent=5 // pred_region
        %s630 = ssub.s32 %s9, 2
      $region98: #{dual_fc_forward.1} parent=5 // pred_fallthru
        _
    $region6: #{dual_fc_forward.1} parent=1 // loop_footer
      %s13 = sadd.s32 1, %s9
    $region7: #{dual_fc_forward.1} parent=1 // loop_footer_branch
      %8 = sbr.rel target = $region3
    $region8: #{dual_fc_forward.1} parent=1 // loop_exit
      _

</llo_original>
